<compile_context>
chip_gen: v7x
topology: tpu7x:2x2x1
jax: 0.10.0
libtpu: 0.0.40
codegen_flags: <defaults>
</compile_context>

<pallas_src>
import functools

import jax
import jax.numpy as jnp
from jax.experimental import pallas as pl
from jax.experimental.pallas import tpu as pltpu

EMB_DIM = 192  # ECAPA x-vector embedding dimension
_COS_EPS = 1e-8  # torch.nn.CosineSimilarity default eps


# ---------------------------------------------------------------------------
# Fused kernel: [2B, T] @ [T, Dp] (K-tiled, MXU)  ->  loss scalar (SMEM)
# ---------------------------------------------------------------------------
def _fused_loss_kernel(xy_ref, w_ref, b_ref, loss_ref, acc_ref,
                       *, loss_type, batch, emb_dim):
    k = pl.program_id(0)

    @pl.when(k == 0)
    def _init():
        acc_ref[...] = jnp.zeros_like(acc_ref)
        loss_ref[0, 0] = 0.0

    # K-step of the stacked embedding matmul (stand-in for encode_batch()).
    acc_ref[...] += jnp.dot(
        xy_ref[...], w_ref[...], preferred_element_type=jnp.float32
    )

    @pl.when(k == pl.num_programs(0) - 1)
    def _finalize():
        emb = acc_ref[...] + b_ref[...]          # [2B, Dp], padded cols == 0
        x_emb = emb[:batch, :]
        y_emb = emb[batch:, :]

        # norm_factor = max(|x_emb|)  (zero padding cannot change the max)
        nf = jnp.max(jnp.abs(x_emb))

        if loss_type == "mse":
            # mean(((x - y) / nf)^2) == sum((x - y)^2) / (nf^2 * B * D)
            d = x_emb - y_emb
            loss_ref[0, 0] = jnp.sum(d * d) / (nf * nf * float(batch * emb_dim))
        else:  # 'cos'
            # cos((x/nf), (y/nf)) with eps floor on the normalized norms:
            #   (x.y)/nf^2 / max(||x||*||y||/nf^2, eps)
            # == (x.y)     / max(||x||*||y||, eps*nf^2)
            num = jnp.sum(x_emb * y_emb, axis=-1, keepdims=True)
            den = jnp.sqrt(jnp.sum(x_emb * x_emb, axis=-1, keepdims=True)) * \
                  jnp.sqrt(jnp.sum(y_emb * y_emb, axis=-1, keepdims=True))
            cos = num / jnp.maximum(den, _COS_EPS * nf * nf)
            loss_ref[0, 0] = 1.0 - jnp.sum(cos) / float(batch)


# ---------------------------------------------------------------------------
# Wrapper mirroring EmbeddingLoss.forward
# ---------------------------------------------------------------------------
def embedding_loss(x_wav, y_denoised_wav, w, b, loss_type="mse", tk=256):
    if loss_type not in ("mse", "cos"):
        raise ValueError("Loss type not recognized")

    # x_wav, y_denoised_wav: [B, 1, T] (mono) -> squeeze channel -> [B, T]
    x = x_wav[:, 0, :].astype(jnp.float32)
    y = y_denoised_wav[:, 0, :].astype(jnp.float32)
    B, T = x.shape
    D = w.shape[1]

    # Stack x and y so the weight matrix is streamed once ([2B, T] matmul).
    xy = jnp.concatenate([x, y], axis=0)

    # Pad the contraction axis to a multiple of the K tile (zero rows of w
    # contribute nothing) and the embedding dim to a lane-dense multiple of 128.
    Tp = int(pl.cdiv(T, tk)) * tk
    Dp = int(pl.cdiv(D, 128)) * 128
    if Tp != T:
        xy = jnp.pad(xy, ((0, 0), (0, Tp - T)))
        w = jnp.pad(w, ((0, Tp - T), (0, 0)))
    if Dp != D:
        w = jnp.pad(w, ((0, 0), (0, Dp - D)))
        b = jnp.pad(b, ((0, 0), (0, Dp - D)))
    w = w.astype(jnp.float32)
    b = b.astype(jnp.float32)

    kernel = functools.partial(
        _fused_loss_kernel, loss_type=loss_type, batch=B, emb_dim=D
    )

    out = pl.pallas_call(
        kernel,
        out_shape=jax.ShapeDtypeStruct((1, 1), jnp.float32),
        grid_spec=pltpu.PrefetchScalarGridSpec(
            num_scalar_prefetch=0,
            grid=(Tp // tk,),
            in_specs=[
                pl.BlockSpec((2 * B, tk), lambda k: (0, k)),   # stacked waves
                pl.BlockSpec((tk, Dp), lambda k: (k, 0)),      # weight K-tile
                pl.BlockSpec((1, Dp), lambda k: (0, 0)),       # bias
            ],
            out_specs=pl.BlockSpec(memory_space=pltpu.MemorySpace.SMEM),
            scratch_shapes=[pltpu.VMEM((2 * B, Dp), jnp.float32)],
        ),
        compiler_params=pltpu.CompilerParams(
            dimension_semantics=("arbitrary",),
        ),
    )(xy, w, b)
    return out[0, 0]
    # TODO(synk): the real ECAPA-TDNN / d-vector encoder (conv/attention stack,
    # mel-spectrogram front-end) is a frozen pretrained network and is replaced
    # here by a deterministic synthetic linear embedding.


if __name__ == "__main__":
    B, T, D = 2, 512, EMB_DIM

    key = jax.random.PRNGKey(0)
    k_x, k_n, k_w, k_b = jax.random.split(key, 4)

    # deterministic synthetic "embedding model" parameters
    w = jax.random.normal(k_w, (T, D), dtype=jnp.float32) / jnp.sqrt(float(T))
    bias = jax.random.normal(k_b, (1, D), dtype=jnp.float32) * 0.01

    # deterministic example waveforms: y is a lightly perturbed x
    x_wav = jax.random.normal(k_x, (B, 1, T), dtype=jnp.float32)
    y_denoised_wav = x_wav + 0.05 * jax.random.normal(k_n, (B, 1, T), dtype=jnp.float32)

    loss_mse = embedding_loss(x_wav, y_denoised_wav, w, bias, loss_type="mse")
    loss_cos = embedding_loss(x_wav, y_denoised_wav, w, bias, loss_type="cos")
    jax.block_until_ready((loss_mse, loss_cos))

    # sanity check against pure-JAX reference
    def _ref(xw, yw, w, b, loss_type):
        xe = xw[:, 0, :] @ w + b
        ye = yw[:, 0, :] @ w + b
        nf = jnp.max(jnp.abs(xe))
        xe, ye = xe / nf, ye / nf
        if loss_type == "mse":
            return jnp.mean((xe - ye) ** 2)
        num = jnp.sum(xe * ye, -1)
        den = jnp.maximum(
            jnp.linalg.norm(xe, axis=-1) * jnp.linalg.norm(ye, axis=-1), _COS_EPS
        )
        return 1.0 - jnp.mean(num / den)

    assert jnp.allclose(loss_mse, _ref(x_wav, y_denoised_wav, w, bias, "mse"), atol=1e-5)
    assert jnp.allclose(loss_cos, _ref(x_wav, y_denoised_wav, w, bias, "cos"), atol=1e-5)

    print("KERNEL_OK")
</pallas_src>

<mosaic_0001>
module attributes {stable_mosaic.version = 11 : i64} {
  func.func @_fused_loss_kernel(%arg0: i32, %arg1: memref<4x256xf32, #tpu.memory_space<vmem>>, %arg2: memref<256x256xf32, #tpu.memory_space<vmem>>, %arg3: memref<1x256xf32, #tpu.memory_space<vmem>>, %arg4: memref<1x1xf32, #tpu.memory_space<smem>>, %arg5: memref<4x256xf32, #tpu.memory_space<vmem>>) attributes {dimension_semantics = [#tpu.dimension_semantics<arbitrary>], iteration_bounds = array<i64: 2>, scalar_prefetch = 0 : i64, scratch_operands = 1 : i64, tpu.core_type = #tpu.core_type<tc>, window_params = [{transform_indices = @transform_0, window_bounds = array<i64: 4, 256>}, {transform_indices = @transform_1, window_bounds = array<i64: 256, 256>}, {pipeline_mode = #tpu.pipeline_mode<synchronous>, transform_indices = @transform_2, window_bounds = array<i64: 1, 256>}, {transform_indices = @transform_3, window_bounds = array<i64: 1, 1>}]} {
    %c0_i32 = arith.constant 0 : i32
    %0 = arith.cmpi eq, %arg0, %c0_i32 : i32
    %1 = arith.extui %0 : i1 to i32
    %c0_i32_0 = arith.constant 0 : i32
    %2 = arith.cmpi ne, %1, %c0_i32_0 : i32
    scf.if %2 {
      %cst_9 = arith.constant 0.000000e+00 : f32
      %12 = vector.broadcast %cst_9 : f32 to vector<4x256xf32>
      %c0_10 = arith.constant 0 : index
      %c0_11 = arith.constant 0 : index
      %13 = vector.load %arg5[%c0_10, %c0_11] : memref<4x256xf32, #tpu.memory_space<vmem>>, vector<4x256xf32>
      tpu.vector_store %arg5[%c0_10, %c0_11], %12 {strides = array<i32>} : memref<4x256xf32, #tpu.memory_space<vmem>>, vector<4x256xf32>,
      %cst_12 = arith.constant 0.000000e+00 : f32
      %c0_13 = arith.constant 0 : index
      %c0_14 = arith.constant 0 : index
      %14 = memref.load %arg4[%c0_13, %c0_14] : memref<1x1xf32, #tpu.memory_space<smem>>
      memref.store %cst_12, %arg4[%c0_13, %c0_14] : memref<1x1xf32, #tpu.memory_space<smem>>
    } else {
    }
    %c0 = arith.constant 0 : index
    %c0_1 = arith.constant 0 : index
    %3 = vector.load %arg5[%c0, %c0_1] : memref<4x256xf32, #tpu.memory_space<vmem>>, vector<4x256xf32>
    %c0_2 = arith.constant 0 : index
    %c0_3 = arith.constant 0 : index
    %4 = vector.load %arg1[%c0_2, %c0_3] : memref<4x256xf32, #tpu.memory_space<vmem>>, vector<4x256xf32>
    %c0_4 = arith.constant 0 : index
    %c0_5 = arith.constant 0 : index
    %5 = vector.load %arg2[%c0_4, %c0_5] : memref<256x256xf32, #tpu.memory_space<vmem>>, vector<256x256xf32>
    %cst = arith.constant dense<0.000000e+00> : vector<4x256xf32>
    %6 = tpu.matmul %4, %5, %cst {dimension_numbers = #tpu.dot_dimension_numbers<[1], [0], [0], [1], [0, 0, 1, 1], [], []>} : vector<4x256xf32>, vector<256x256xf32>, vector<4x256xf32> -> vector<4x256xf32>
    %7 = arith.addf %3, %6 : vector<4x256xf32>
    %c0_6 = arith.constant 0 : index
    %c0_7 = arith.constant 0 : index
    %8 = vector.load %arg5[%c0_6, %c0_7] : memref<4x256xf32, #tpu.memory_space<vmem>>, vector<4x256xf32>
    tpu.vector_store %arg5[%c0_6, %c0_7], %7 {strides = array<i32>} : memref<4x256xf32, #tpu.memory_space<vmem>>, vector<4x256xf32>,
    %c1_i32 = arith.constant 1 : i32
    %9 = arith.cmpi eq, %arg0, %c1_i32 : i32
    %10 = arith.extui %9 : i1 to i32
    %c0_i32_8 = arith.constant 0 : i32
    %11 = arith.cmpi ne, %10, %c0_i32_8 : i32
    scf.if %11 {
      %c0_9 = arith.constant 0 : index
      %c0_10 = arith.constant 0 : index
      %12 = vector.load %arg5[%c0_9, %c0_10] : memref<4x256xf32, #tpu.memory_space<vmem>>, vector<4x256xf32>
      %c0_11 = arith.constant 0 : index
      %c0_12 = arith.constant 0 : index
      %13 = vector.load %arg3[%c0_11, %c0_12] : memref<1x256xf32, #tpu.memory_space<vmem>>, vector<1x256xf32>
      %14 = vector.broadcast %13 : vector<1x256xf32> to vector<4x256xf32>
      %15 = arith.addf %12, %14 : vector<4x256xf32>
      %16 = vector.extract_strided_slice %15 {offsets = [0, 0], sizes = [2, 256], strides = [1, 1]} : vector<4x256xf32> to vector<2x256xf32>
      %17 = vector.extract_strided_slice %15 {offsets = [2, 0], sizes = [2, 256], strides = [1, 1]} : vector<4x256xf32> to vector<2x256xf32>
      %18 = math.absf %16 : vector<2x256xf32>
      %19 = vector.shape_cast %18 : vector<2x256xf32> to vector<1x2x256xf32>
      %cst_13 = arith.constant dense<0xFF800000> : vector<1xf32>
      %20 = vector.multi_reduction <maximumf>, %19, %cst_13 [1, 2] : vector<1x2x256xf32> to vector<1xf32>
      %21 = vector.shape_cast %20 : vector<1xf32> to vector<1x1x1xf32>
      %22 = vector.extract %21[0, 0, 0] : f32 from vector<1x1x1xf32>
      %23 = arith.subf %16, %17 : vector<2x256xf32>
      %24 = arith.mulf %23, %23 : vector<2x256xf32>
      %25 = vector.shape_cast %24 : vector<2x256xf32> to vector<1x2x256xf32>
      %cst_14 = arith.constant dense<0.000000e+00> : vector<1xf32>
      %26 = vector.multi_reduction <add>, %25, %cst_14 [1, 2] : vector<1x2x256xf32> to vector<1xf32>
      %27 = vector.shape_cast %26 : vector<1xf32> to vector<1x1x1xf32>
      %28 = vector.extract %27[0, 0, 0] : f32 from vector<1x1x1xf32>
      %29 = arith.mulf %22, %22 : f32
      %cst_15 = arith.constant 3.840000e+02 : f32
      %30 = arith.mulf %29, %cst_15 : f32
      %31 = arith.divf %28, %30 : f32
      %c0_16 = arith.constant 0 : index
      %c0_17 = arith.constant 0 : index
      %32 = memref.load %arg4[%c0_16, %c0_17] : memref<1x1xf32, #tpu.memory_space<smem>>
      memref.store %31, %arg4[%c0_16, %c0_17] : memref<1x1xf32, #tpu.memory_space<smem>>
    } else {
    }
    return
  }
  func.func @transform_0(%arg0: i32) -> (i32, i32) {
    %c0_i32 = arith.constant 0 : i32
    %c0_i32_0 = arith.constant 0 : i32
    return %c0_i32, %arg0 : i32, i32
  }
  func.func @transform_1(%arg0: i32) -> (i32, i32) {
    %c0_i32 = arith.constant 0 : i32
    %c0_i32_0 = arith.constant 0 : i32
    return %arg0, %c0_i32 : i32, i32
  }
  func.func @transform_2(%arg0: i32) -> (i32, i32) {
    %c0_i32 = arith.constant 0 : i32
    %c0_i32_0 = arith.constant 0 : i32
    %c0_i32_1 = arith.constant 0 : i32
    return %c0_i32, %c0_i32_0 : i32, i32
  }
  func.func @transform_3(%arg0: i32) -> (i32, i32) {
    %c0_i32 = arith.constant 0 : i32
    %c0_i32_0 = arith.constant 0 : i32
    %c0_i32_1 = arith.constant 0 : i32
    return %c0_i32, %c0_i32_0 : i32, i32
  }
}

</mosaic_0001>

<llo_original>
// kernel: tpu_custom_call.1
$region0: #{tpu_custom_call.1}
  #allocation0 [shape = 'u32[]', space=smem, size = 0x4, offset = 0x4, fixed_abs, tag = 'smem constant byte address 0x4 - core index']
  #allocation1 [shape = 'u32[144,128]{1,0:T(1,128)}', space=vmem, size = 0x12000, scoped, tag = 'internal scratch']
  #allocation2 [shape = 'f32[4,256]{1,0:T(4,128)}', space=vmem, size = 0x1000, scoped, tag = 'scratch operand']
  %s0 = inlined_call_operand.hbm [shape: f32[4,512], index: 0, kind: input, shape index: {}]
  %s1 = inlined_call_operand.hbm [shape: f32[512,256], index: 1, kind: input, shape index: {}]
  %s2 = inlined_call_operand.vmem [shape: f32[1,256], index: 2, kind: input, shape index: {}]
  %s3 = inlined_call_operand.hbm [shape: f32[1,1], index: 3, kind: output, shape index: {}]
  %s4 = sld [smem:[#allocation0]]
  $region61: #{tpu_custom_call.1} parent=0
    _
  %s6 = ssub.s32 1, %s4
  %s7 = scalar_select 0, %s6, %s4
  $region1: #{tpu_custom_call.1} parent=0
    #allocation3 [shape = 'u8[8192]{0}', space=vmem, size = 0x2000, scoped, tag = 'input window, operand 0']
    #allocation4 [shape = 's32[2]{0}', space=sflag, size = 0x8, scoped, tag = 'scoped memory for tpu_custom_call.1']
    #allocation5 [shape = 's32[2]{0}', space=sflag, size = 0x8, scoped, tag = 'scoped memory for tpu_custom_call.1']
    #allocation6 [shape = 'u8[524288]{0}', space=vmem, size = 0x80000, scoped, tag = 'input window, operand 1']
    #allocation7 [shape = 's32[2]{0}', space=sflag, size = 0x8, scoped, tag = 'scoped memory for tpu_custom_call.1']
    #allocation8 [shape = 'u8[512]{0}', space=smem, size = 0x200, scoped, tag = 'output window, operand 0, single buffered']
    %8 = vsyncpa [#allocation4], 0
    %s9 = scalar_lea.sflag [#allocation4], 1
    %10 = vsyncpa %s9, 0
    %11 = vsyncpa [#allocation7], 0
    %s12 = scalar_lea.sflag [#allocation7], 1
    %13 = vsyncpa %s12, 0
    %14 = vsyncpa [#allocation5], 0
    loop: start=0, step=1, limit=4
    $region2: #{tpu_custom_call.1} parent=1 // loop_pre_header
      _
    $region3: #{tpu_custom_call.1} parent=1 // loop_header
      %s16 = sphi 0, %s20
      %p17 = scmp.ge.s32.totalorder %s16, 4
      %s26 = sphi 0, %s28
      %s29 = sphi 0, %s26
      %s30 = sphi 0, %s29
      %s46 = sphi 0, %s30
      %s52 = sphi 0, %s54
      %s55 = sphi 0, %s52
      %s56 = sphi 0, %s55
      %s72 = sphi 0, %s56
      %s76 = sphi 0, %s76
      %s78 = sphi 0, %s76
      %s79 = sphi 0, %s78
      %s93 = sphi 0, %s79
      %s97 = sphi 0, %s97
      %s99 = sphi 0, %s97
      %s100 = sphi 0, %s99
      %s114 = sphi 0, %s100
    $region4: #{tpu_custom_call.1} parent=1 // loop_header_branch
      %19 = sbr.rel (%p17) target = $region8
    $region5: #{tpu_custom_call.1} parent=1 // loop_body
      %s21 = ssub.s32 %s16, 1
      %s22 = ssub.s32 %s16, 2
      %s23 = sadd.s32 %s16, 1
      %s24 = ssub.s32 %s16, %s23
      %p25 = scmp.eq.s32.totalorder %s24, 0
      %s27 = sadd.s32 %s26, 1
      %s28 = scalar_select %p25, %s26, %s27
      %p31 = pneg %p25
      %p32 = scmp.eq.s32.totalorder %s16, 1
      %p33 = por %p31, %p32
      %p34 = scmp.ne.s32.totalorder %s26, %s29
      %p35 = scmp.eq.s32.totalorder %s16, 0
      %p36 = por %p34, %p35
      %p37 = scmp.ne.s32.totalorder %s26, %s29
      %p38 = scmp.eq.s32.totalorder %s21, 1
      %p39 = por %p37, %p38
      %p40 = scmp.ne.s32.totalorder %s29, %s30
      %p41 = scmp.eq.s32.totalorder %s21, 0
      %p42 = por %p40, %p41
      %p43 = scmp.ne.s32.totalorder %s29, %s30
      %p44 = scmp.eq.s32.totalorder %s22, 1
      %p45 = por %p43, %p44
      %p47 = scmp.ne.s32.totalorder %s30, %s46
      %p48 = scmp.eq.s32.totalorder %s22, 0
      %p49 = por %p47, %p48
      %s50 = ssub.s32 %s16, %s23
      %p51 = scmp.eq.s32.totalorder %s50, 0
      %s53 = sadd.s32 %s52, 1
      %s54 = scalar_select %p51, %s52, %s53
      %p57 = pneg %p51
      %p58 = scmp.eq.s32.totalorder %s16, 1
      %p59 = por %p57, %p58
      %p60 = scmp.ne.s32.totalorder %s52, %s55
      %p61 = scmp.eq.s32.totalorder %s16, 0
      %p62 = por %p60, %p61
      %p63 = scmp.ne.s32.totalorder %s52, %s55
      %p64 = scmp.eq.s32.totalorder %s21, 1
      %p65 = por %p63, %p64
      %p66 = scmp.ne.s32.totalorder %s55, %s56
      %p67 = scmp.eq.s32.totalorder %s21, 0
      %p68 = por %p66, %p67
      %p69 = scmp.ne.s32.totalorder %s55, %s56
      %p70 = scmp.eq.s32.totalorder %s22, 1
      %p71 = por %p69, %p70
      %p73 = scmp.ne.s32.totalorder %s56, %s72
      %p74 = scmp.eq.s32.totalorder %s22, 0
      %p75 = por %p73, %p74
      %s77 = sadd.s32 %s76, 1
      %p80 = scmp.eq.s32.totalorder %s16, 1
      %p81 = scmp.ne.s32.totalorder %s76, %s78
      %p82 = scmp.eq.s32.totalorder %s16, 0
      %p83 = por %p81, %p82
      %p84 = scmp.ne.s32.totalorder %s76, %s78
      %p85 = scmp.eq.s32.totalorder %s21, 1
      %p86 = por %p84, %p85
      %p87 = scmp.ne.s32.totalorder %s78, %s79
      %p88 = scmp.eq.s32.totalorder %s21, 0
      %p89 = por %p87, %p88
      %p90 = scmp.ne.s32.totalorder %s78, %s79
      %p91 = scmp.eq.s32.totalorder %s22, 1
      %p92 = por %p90, %p91
      %p94 = scmp.ne.s32.totalorder %s79, %s93
      %p95 = scmp.eq.s32.totalorder %s22, 0
      %p96 = por %p94, %p95
      %s98 = sadd.s32 %s97, 1
      %p101 = scmp.eq.s32.totalorder %s16, 1
      %p102 = scmp.ne.s32.totalorder %s97, %s99
      %p103 = scmp.eq.s32.totalorder %s16, 0
      %p104 = por %p102, %p103
      %p105 = scmp.ne.s32.totalorder %s97, %s99
      %p106 = scmp.eq.s32.totalorder %s21, 1
      %p107 = por %p105, %p106
      %p108 = scmp.ne.s32.totalorder %s99, %s100
      %p109 = scmp.eq.s32.totalorder %s21, 0
      %p110 = por %p108, %p109
      %p111 = scmp.ne.s32.totalorder %s99, %s100
      %p112 = scmp.eq.s32.totalorder %s22, 1
      %p113 = por %p111, %p112
      %p115 = scmp.ne.s32.totalorder %s100, %s114
      %p116 = scmp.eq.s32.totalorder %s22, 0
      %p117 = por %p115, %p116
      %p118 = scmp.le.s32.totalorder 1, %s16
      %p119 = scmp.lt.s32.totalorder %s16, 3
      %p120 = pnand %p118, %p119
      %p121 = pneg %p120
      // Predicated region
      $region9: #{tpu_custom_call.1} parent=5 // pred_check
        _
      $region10: #{tpu_custom_call.1} parent=5 // pred_check_branch
        %123 = sbr.rel (%p120) target = $region12
      $region11: #{tpu_custom_call.1} parent=5 // pred_region
        %s124 = ssub.s32 %s16, 1
        // Predicated region
        $region13: #{tpu_custom_call.1} parent=11 // pred_check
          %p125 = pneg %p89
        $region14: #{tpu_custom_call.1} parent=11 // pred_check_branch
          %127 = sbr.rel (%p125) target = $region16
        $region15: #{tpu_custom_call.1} parent=11 // pred_region
          _
        $region16: #{tpu_custom_call.1} parent=11 // pred_fallthru
          _
      $region12: #{tpu_custom_call.1} parent=5 // pred_fallthru
        _
      %p128 = scmp.lt.s32.totalorder %s16, 2
      // Predicated region
      $region17: #{tpu_custom_call.1} parent=5 // pred_check
        %p129 = pneg %p128
      $region18: #{tpu_custom_call.1} parent=5 // pred_check_branch
        %131 = sbr.rel (%p129) target = $region20
      $region19: #{tpu_custom_call.1} parent=5 // pred_region
        // Predicated region
        $region21: #{tpu_custom_call.1} parent=19 // pred_check
          %p132 = pneg %p36
        $region22: #{tpu_custom_call.1} parent=19 // pred_check_branch
          %134 = sbr.rel (%p132) target = $region24
        $region23: #{tpu_custom_call.1} parent=19 // pred_region
          %s135 = sand.u32 %s26, 1
          %s136 = scalar_lea.sflag [#allocation4], %s135
          %s137 = sand.u32 %s26, 1
          %s138 = smul.addr %s137, 8
          %s139 = scalar_lea.vmem [#allocation3], %s138
          %s140 = smul.u32 2, %s16
          %s142 = ssub.s32 128, 128
          %143 = vsyncadd %s136, %s142
          %s144 = smul.addr %s140, 64
          %s145 = scalar_lea.hbm %s0, %s144
          %s147 = sshll.u32 %s139, 4
          %s148 = int_to_ptr.vmem [resolvable:$true] %s147
          %150 = dma.hbm_to_vmem [thread:$0]  %s145, 128, %s148, %s136
        $region24: #{tpu_custom_call.1} parent=19 // pred_fallthru
          _
        // Predicated region
        $region25: #{tpu_custom_call.1} parent=19 // pred_check
          %p151 = pneg %p62
        $region26: #{tpu_custom_call.1} parent=19 // pred_check_branch
          %153 = sbr.rel (%p151) target = $region28
        $region27: #{tpu_custom_call.1} parent=19 // pred_region
          %s154 = sand.u32 %s52, 1
          %s155 = scalar_lea.sflag [#allocation7], %s154
          %s156 = sand.u32 %s52, 1
          %s157 = smul.addr %s156, 512
          %s158 = scalar_lea.vmem [#allocation6], %s157
          %s159 = smul.u32 32, %s16
          %s161 = ssub.s32 8192, 8192
          %162 = vsyncadd %s155, %s161
          %s163 = smul.addr %s159, 2
          %s164 = smul.addr %s163, 128
          %s165 = scalar_lea.hbm %s1, %s164
          %s166 = sshll.u32 %s158, 4
          %s167 = int_to_ptr.vmem [resolvable:$true] %s166
          %172 = dma.hbm_to_vmem [thread:$0]  %s165, 8192, %s167, %s155, 256, 256, 16
        $region28: #{tpu_custom_call.1} parent=19 // pred_fallthru
          _
      $region20: #{tpu_custom_call.1} parent=5 // pred_fallthru
        _
      %p173 = scmp.le.s32.totalorder 1, %s16
      %p174 = scmp.lt.s32.totalorder %s16, 3
      %p175 = pnand %p173, %p174
      %p176 = pneg %p175
      // Predicated region
      $region29: #{tpu_custom_call.1} parent=5 // pred_check
        _
      $region30: #{tpu_custom_call.1} parent=5 // pred_check_branch
        %178 = sbr.rel (%p175) target = $region32
      $region31: #{tpu_custom_call.1} parent=5 // pred_region
        %s179 = ssub.s32 %s16, 1
        %s180 = sand.u32 %s29, 1
        %s181 = scalar_lea.sflag [#allocation4], %s180
        %s182 = sand.u32 %s29, 1
        %s183 = smul.addr %s182, 8
        %s184 = scalar_lea.vmem [#allocation3], %s183
        // Predicated region
        $region33: #{tpu_custom_call.1} parent=31 // pred_check
          %p185 = pneg %p42
        $region34: #{tpu_custom_call.1} parent=31 // pred_check_branch
          %187 = sbr.rel (%p185) target = $region36
        $region35: #{tpu_custom_call.1} parent=31 // pred_region
          %188 = dma.done %s181, 128
        $region36: #{tpu_custom_call.1} parent=31 // pred_fallthru
          _
        %s189 = sand.u32 %s55, 1
        %s190 = scalar_lea.sflag [#allocation7], %s189
        %s191 = sand.u32 %s55, 1
        %s192 = smul.addr %s191, 512
        %s193 = scalar_lea.vmem [#allocation6], %s192
        // Predicated region
        $region37: #{tpu_custom_call.1} parent=31 // pred_check
          %p194 = pneg %p68
        $region38: #{tpu_custom_call.1} parent=31 // pred_check_branch
          %196 = sbr.rel (%p194) target = $region40
        $region39: #{tpu_custom_call.1} parent=31 // pred_region
          %197 = dma.done %s190, 8192
        $region40: #{tpu_custom_call.1} parent=31 // pred_fallthru
          _
        %s198 = sand.u32 %s29, 1
        %s199 = scalar_lea.sflag [#allocation4], %s198
        %s200 = sand.u32 %s29, 1
        %s201 = smul.addr %s200, 8
        %s202 = scalar_lea.vmem [#allocation3], %s201
        %p203 = pneg %p42
        %p204 = pneg %p39
        %s205 = sand.u32 %s55, 1
        %s206 = scalar_lea.sflag [#allocation7], %s205
        %s207 = sand.u32 %s55, 1
        %s208 = smul.addr %s207, 512
        %s209 = scalar_lea.vmem [#allocation6], %s208
        %p210 = pneg %p68
        %p211 = pneg %p65
        %p212 = pneg %p89
        %p213 = pneg %p86
        %p214 = pneg %p110
        %p215 = pneg %p107
        %s216 = smul.u32 2, %s21
        %s217 = smul.u32 32, %s21
        %p218 = scmp.eq.s32.totalorder %s21, 0
        // Predicated region
        $region41: #{tpu_custom_call.1} parent=31 // pred_check
          %p219 = pneg %p218
        $region42: #{tpu_custom_call.1} parent=31 // pred_check_branch
          %221 = sbr.rel (%p219) target = $region44
        $region43: #{tpu_custom_call.1} parent=31 // pred_region
          %222 = vst [vmem:[#allocation2] sm:$0xff] 0.0
          %s223 = scalar_lea.smem [#allocation8], 0
          %224 = sst [smem:[%s223]] 0.0
        $region44: #{tpu_custom_call.1} parent=31 // pred_fallthru
          _
        %v225 = vld [vmem:[#allocation2] sm:$0xff]
        %v226 = vld [vmem:[%s184] sm:$0xff]
        %v227 = vld [vmem:[%s193] sm:$0xff]
        %v228 = vld [vmem:[%s193 + $0x8] sm:$0xff]
        %v229 = vld [vmem:[%s193 + $0x10] sm:$0xff]
        %v230 = vld [vmem:[%s193 + $0x18] sm:$0xff]
        %v231 = vld [vmem:[%s193 + $0x20] sm:$0xff]
        %v232 = vld [vmem:[%s193 + $0x28] sm:$0xff]
        %v233 = vld [vmem:[%s193 + $0x30] sm:$0xff]
        %v234 = vld [vmem:[%s193 + $0x38] sm:$0xff]
        %v235 = vld [vmem:[%s193 + $0x40] sm:$0xff]
        %v236 = vld [vmem:[%s193 + $0x48] sm:$0xff]
        %v237 = vld [vmem:[%s193 + $0x50] sm:$0xff]
        %v238 = vld [vmem:[%s193 + $0x58] sm:$0xff]
        %v239 = vld [vmem:[%s193 + $0x60] sm:$0xff]
        %v240 = vld [vmem:[%s193 + $0x68] sm:$0xff]
        %v241 = vld [vmem:[%s193 + $0x70] sm:$0xff]
        %v242 = vld [vmem:[%s193 + $0x78] sm:$0xff]
        %v243 = vld [vmem:[%s193 + $0x80] sm:$0xff]
        %v244 = vld [vmem:[%s193 + $0x88] sm:$0xff]
        %v245 = vld [vmem:[%s193 + $0x90] sm:$0xff]
        %v246 = vld [vmem:[%s193 + $0x98] sm:$0xff]
        %v247 = vld [vmem:[%s193 + $0xa0] sm:$0xff]
        %v248 = vld [vmem:[%s193 + $0xa8] sm:$0xff]
        %v249 = vld [vmem:[%s193 + $0xb0] sm:$0xff]
        %v250 = vld [vmem:[%s193 + $0xb8] sm:$0xff]
        %v251 = vld [vmem:[%s193 + $0xc0] sm:$0xff]
        %v252 = vld [vmem:[%s193 + $0xc8] sm:$0xff]
        %v253 = vld [vmem:[%s193 + $0xd0] sm:$0xff]
        %v254 = vld [vmem:[%s193 + $0xd8] sm:$0xff]
        %v255 = vld [vmem:[%s193 + $0xe0] sm:$0xff]
        %v256 = vld [vmem:[%s193 + $0xe8] sm:$0xff]
        %v257 = vld [vmem:[%s193 + $0xf0] sm:$0xff]
        %v258 = vld [vmem:[%s193 + $0xf8] sm:$0xff]
        %v259 = vld [vmem:[%s193 + $0x100] sm:$0xff]
        %v260 = vld [vmem:[%s193 + $0x108] sm:$0xff]
        %v261 = vld [vmem:[%s193 + $0x110] sm:$0xff]
        %v262 = vld [vmem:[%s193 + $0x118] sm:$0xff]
        %v263 = vld [vmem:[%s193 + $0x120] sm:$0xff]
        %v264 = vld [vmem:[%s193 + $0x128] sm:$0xff]
        %v265 = vld [vmem:[%s193 + $0x130] sm:$0xff]
        %v266 = vld [vmem:[%s193 + $0x138] sm:$0xff]
        %v267 = vld [vmem:[%s193 + $0x140] sm:$0xff]
        %v268 = vld [vmem:[%s193 + $0x148] sm:$0xff]
        %v269 = vld [vmem:[%s193 + $0x150] sm:$0xff]
        %v270 = vld [vmem:[%s193 + $0x158] sm:$0xff]
        %v271 = vld [vmem:[%s193 + $0x160] sm:$0xff]
        %v272 = vld [vmem:[%s193 + $0x168] sm:$0xff]
        %v273 = vld [vmem:[%s193 + $0x170] sm:$0xff]
        %v274 = vld [vmem:[%s193 + $0x178] sm:$0xff]
        %v275 = vld [vmem:[%s193 + $0x180] sm:$0xff]
        %v276 = vld [vmem:[%s193 + $0x188] sm:$0xff]
        %v277 = vld [vmem:[%s193 + $0x190] sm:$0xff]
        %v278 = vld [vmem:[%s193 + $0x198] sm:$0xff]
        %v279 = vld [vmem:[%s193 + $0x1a0] sm:$0xff]
        %v280 = vld [vmem:[%s193 + $0x1a8] sm:$0xff]
        %v281 = vld [vmem:[%s193 + $0x1b0] sm:$0xff]
        %v282 = vld [vmem:[%s193 + $0x1b8] sm:$0xff]
        %v283 = vld [vmem:[%s193 + $0x1c0] sm:$0xff]
        %v284 = vld [vmem:[%s193 + $0x1c8] sm:$0xff]
        %v285 = vld [vmem:[%s193 + $0x1d0] sm:$0xff]
        %v286 = vld [vmem:[%s193 + $0x1d8] sm:$0xff]
        %v287 = vld [vmem:[%s193 + $0x1e0] sm:$0xff]
        %v288 = vld [vmem:[%s193 + $0x1e8] sm:$0xff]
        %v289 = vld [vmem:[%s193 + $0x1f0] sm:$0xff]
        %v290 = vld [vmem:[%s193 + $0x1f8] sm:$0xff]
        %v292 = vcombine.high %v226, %v226
        %294 = vmatprep.subr.mxu0 %v228
        %295 = vmatpush1.msra.mxu0 %v227
        %296 = vmatprep.subr.mxu0 %v230
        %297 = vmatpush1.msra.mxu0 %v229
        %298 = vmatprep.subr.mxu0 %v232
        %299 = vmatpush1.msra.mxu0 %v231
        %300 = vmatprep.subr.mxu0 %v234
        %301 = vmatpush1.msra.mxu0 %v233
        %302 = vmatprep.subr.mxu0 %v236
        %303 = vmatpush1.msra.mxu0 %v235
        %304 = vmatprep.subr.mxu0 %v238
        %305 = vmatpush1.msra.mxu0 %v237
        %306 = vmatprep.subr.mxu0 %v240
        %307 = vmatpush1.msra.mxu0 %v239
        %308 = vmatprep.subr.mxu0 %v242
        %309 = vmatpush1.msra.mxu0 %v241
        %310 = vmatprep.subr.mxu0 %v244
        %311 = vmatpush1.msra.mxu0 %v243
        %312 = vmatprep.subr.mxu0 %v246
        %313 = vmatpush1.msra.mxu0 %v245
        %314 = vmatprep.subr.mxu0 %v248
        %315 = vmatpush1.msra.mxu0 %v247
        %316 = vmatprep.subr.mxu0 %v250
        %317 = vmatpush1.msra.mxu0 %v249
        %318 = vmatprep.subr.mxu0 %v252
        %319 = vmatpush1.msra.mxu0 %v251
        %320 = vmatprep.subr.mxu0 %v254
        %321 = vmatpush1.msra.mxu0 %v253
        %322 = vmatprep.subr.mxu0 %v256
        %323 = vmatpush1.msra.mxu0 %v255
        %324 = vmatprep.subr.mxu0 %v258
        %325 = vmatpush1.msra.mxu0 %v257
        %326 = vmatprep.subr.mxu0 %v260
        %327 = vmatpush1.msra.mxu0 %v259
        %328 = vmatprep.subr.mxu0 %v262
        %329 = vmatpush1.msra.mxu0 %v261
        %330 = vmatprep.subr.mxu0 %v264
        %331 = vmatpush1.msra.mxu0 %v263
        %332 = vmatprep.subr.mxu0 %v266
        %333 = vmatpush1.msra.mxu0 %v265
        %334 = vmatprep.subr.mxu0 %v268
        %335 = vmatpush1.msra.mxu0 %v267
        %336 = vmatprep.subr.mxu0 %v270
        %337 = vmatpush1.msra.mxu0 %v269
        %338 = vmatprep.subr.mxu0 %v272
        %339 = vmatpush1.msra.mxu0 %v271
        %340 = vmatprep.subr.mxu0 %v274
        %341 = vmatpush1.msra.mxu0 %v273
        %342 = vmatprep.subr.mxu0 %v276
        %343 = vmatpush1.msra.mxu0 %v275
        %344 = vmatprep.subr.mxu0 %v278
        %345 = vmatpush1.msra.mxu0 %v277
        %346 = vmatprep.subr.mxu0 %v280
        %347 = vmatpush1.msra.mxu0 %v279
        %348 = vmatprep.subr.mxu0 %v282
        %349 = vmatpush1.msra.mxu0 %v281
        %350 = vmatprep.subr.mxu0 %v284
        %351 = vmatpush1.msra.mxu0 %v283
        %352 = vmatprep.subr.mxu0 %v286
        %353 = vmatpush1.msra.mxu0 %v285
        %354 = vmatprep.subr.mxu0 %v288
        %355 = vmatpush1.msra.mxu0 %v287
        %356 = vmatprep.subr.mxu0 %v290
        %357 = vmatpush1.msra.mxu0 %v289
        %358 = vmatprep.mubr.f32.mxu0 %v292
        %359 = vmatmul.mubr.f32.gmra.mrb[0].mxu0 %v226
        %v360 = vpop.f32.mrb[0].mxu0
        %v361 = vadd.f32 0.0, %v360
        %v362 = vpop.f32.mrb[0].mxu0
        %v363 = vadd.f32 0.0, %v362
        %364 = vdwg.mxu0
        %v367 = vcombine.low %v361, %v363
        %v369 = vadd.f32 %v225, %v367
        %370 = vst [vmem:[#allocation2] sm:$0xff] %v369
        %p371 = scmp.eq.s32.totalorder %s21, 1
        // Predicated region
        $region45: #{tpu_custom_call.1} parent=31 // pred_check
          %p372 = pneg %p371
        $region46: #{tpu_custom_call.1} parent=31 // pred_check_branch
          %374 = sbr.rel (%p372) target = $region48
        $region47: #{tpu_custom_call.1} parent=31 // pred_region
          %v375 = vld [vmem:[#allocation2] sm:$0xff]
          %v376 = vld [vmem:[%s2] sm:$0x3]
          %v378 = vlaneseq
          %v379 = vshrl.u32 %v378, 7
          %v380 = vsub.s32 0, %v379
          %v381 = vrot.slane %v376, %v380
          %v382 = vlaneseq
          %v383 = vshrl.u32 %v382, 7
          %v384 = vsub.s32 1, %v383
          %v385 = vrot.slane %v376, %v384
          %v386 = vcombine.low %v381, %v385
          %v388 = vadd.f32 %v375, %v386
          %v389 = vand.u32 2147483647, %v388
          %v391 = vcombine.high %v389, %v389
          %vm393 = vcmask 1041408
          %v394 = vsel %vm393, %v389, -inf
          %v395 = vsel %vm393, %v391, -inf
          %v396 = vmax.f32 %v394, %v395
          %397 = vmax.xlane.f32.xlu0 %v396
          %v398 = vpop.xlane.xlu0 %397
          %v399 = vrot.slane %v398, 4
          %v400 = vmax.f32 %v398, %v399
          %v401 = vrot.slane %v400, 2
          %v402 = vmax.f32 %v400, %v401
          %v403 = vrot.slane %v402, 1
          %v404 = vmax.f32 %v402, %v403
          %s405 = vtos %v404
          %v407 = vrot.slane %v388, 6
          %v408 = vrot.slane %v407, 4
          %v410 = vsub.f32 %v388, %v408
          %v411 = vmul.f32 %v410, %v410
          %v413 = vcombine.high %v411, %v411
          %v415 = vsel %vm393, %v411, 0.0
          %v416 = vsel %vm393, %v413, 0.0
          %v417 = vadd.f32 %v415, %v416
          %418 = vadd.xlane.f32.xlu0 %v417
          %v419 = vpop.xlane.xlu0 %418
          %v420 = vrot.slane %v419, 4
          %v421 = vadd.f32 %v419, %v420
          %v422 = vrot.slane %v421, 2
          %v423 = vadd.f32 %v421, %v422
          %v424 = vrot.slane %v423, 1
          %v425 = vadd.f32 %v423, %v424
          %s426 = vtos %v425
          %s427 = smul.f32 %s405, %s405
          %s428 = smul.f32 %s427, 384.0
          %v429 = vstv %s428
          %v430 = vrcp.pop %v429
          %s431 = vtos %v430
          %s432 = smul.f32 %s426, %s431
          %s433 = scalar_lea.smem [#allocation8], 0
          %434 = sst [smem:[%s433]] %s432
        $region48: #{tpu_custom_call.1} parent=31 // pred_fallthru
          _
        // Predicated region
        $region49: #{tpu_custom_call.1} parent=31 // pred_check
          %p435 = pneg %p107
        $region50: #{tpu_custom_call.1} parent=31 // pred_check_branch
          %437 = sbr.rel (%p435) target = $region52
        $region51: #{tpu_custom_call.1} parent=31 // pred_region
          %s439 = ssub.s32 16, 16
          %440 = vsyncadd [#allocation5], %s439
          %443 = dma.smem_to_hbm [#allocation8], 16, %s3, [#allocation5]
        $region52: #{tpu_custom_call.1} parent=31 // pred_fallthru
          _
        // Predicated region
        $region53: #{tpu_custom_call.1} parent=31 // pred_check
          %p444 = pneg %p107
        $region54: #{tpu_custom_call.1} parent=31 // pred_check_branch
          %446 = sbr.rel (%p444) target = $region56
        $region55: #{tpu_custom_call.1} parent=31 // pred_region
          %447 = dma.done [#allocation5], 16
        $region56: #{tpu_custom_call.1} parent=31 // pred_fallthru
          _
        %448 = sfence
      $region32: #{tpu_custom_call.1} parent=5 // pred_fallthru
        _
      %p449 = scmp.le.s32.totalorder 2, %s16
      // Predicated region
      $region57: #{tpu_custom_call.1} parent=5 // pred_check
        %p450 = pneg %p449
      $region58: #{tpu_custom_call.1} parent=5 // pred_check_branch
        %452 = sbr.rel (%p450) target = $region60
      $region59: #{tpu_custom_call.1} parent=5 // pred_region
        %s453 = ssub.s32 %s16, 2
      $region60: #{tpu_custom_call.1} parent=5 // pred_fallthru
        _
    $region6: #{tpu_custom_call.1} parent=1 // loop_footer
      %s20 = sadd.s32 1, %s16
    $region7: #{tpu_custom_call.1} parent=1 // loop_footer_branch
      %15 = sbr.rel target = $region3
    $region8: #{tpu_custom_call.1} parent=1 // loop_exit
      _
    %454 = vsyncpa [#allocation4], 1
    %s455 = scalar_lea.sflag [#allocation4], 1
    %456 = vsyncpa %s455, 1
    %457 = vsyncpa [#allocation7], 1
    %s458 = scalar_lea.sflag [#allocation7], 1
    %459 = vsyncpa %s458, 1
    %460 = vsyncpa [#allocation5], 1
    %s461 = scalar_lea.sflag [#allocation5], 1
    %462 = vsyncpa %s461, 1

</llo_original>
